<compile_context>
chip_gen: v5e
topology: v5e:2x2
jax: 0.10.0
libtpu: 0.0.40
codegen_flags: <defaults>
</compile_context>

<pallas_src>
import functools

import jax
import jax.numpy as jnp
from jax import lax
from jax.experimental import pallas as pl
from jax.experimental.pallas import tpu as pltpu

EPS = 1e-5
_LANE = 128
_SUBLANE = 8
_MiB = 1024 * 1024


def _round_up(x, m):
    return ((x + m - 1) // m) * m


def _physical_vmem_bytes():
    """Per-TensorCore physical VMEM, used only for tile-size budgeting."""
    try:
        kind = jax.devices()[0].device_kind.lower()
    except Exception:
        kind = ""
    if any(tag in kind for tag in ("v4", "v5", "v6")):
        return 128 * _MiB
    return 64 * _MiB  # v7x and unknown parts: conservative


def _vmem_bytes_estimate(tb, f_pad, d_pad, *, x_itemsize=4, w_itemsize=4,
                         weight_bufs=1, io_bufs=2):
    """Resident weights (weight_bufs deep), pipelined x/out tiles (io_bufs deep),
    plus the f32 h0/h1/accumulator intermediates the kernel keeps live."""
    weights = weight_bufs * (f_pad * d_pad + d_pad * d_pad + 2 * d_pad) * w_itemsize
    affine = weight_bufs * 2 * f_pad * 4                 # scale / shift (f32)
    io = io_bufs * tb * (f_pad + d_pad) * x_itemsize     # x / out pipeline buffers
    intermediates = tb * (f_pad + 2 * d_pad) * 4         # h0, h1, f32 matmul acc
    return weights + affine + io + intermediates


# --------------------------------------------------------------------------
# Kernel: one batch tile; all weights resident (single-buffered) in VMEM.
# --------------------------------------------------------------------------
def _linear_mapping_kernel(x_ref, scale_ref, shift_ref,
                           w1_ref, b1_ref, w2_ref, b2_ref, out_ref):
    """x:(TB,Fp) scale/shift:(1,Fp) w1:(Fp,Dp) b1:(1,Dp) w2:(Dp,Dp) b2:(1,Dp)."""
    x = x_ref[...]

    # Folded BatchNorm affine (2 VPU ops/elem) + ReLU.
    h0 = jnp.maximum(x * scale_ref[...] + shift_ref[...], 0.0)

    # Explicit MXU precision: true-f32 passes for f32 weights (holds the 1e-4
    # tolerance even for large K); DEFAULT when weights are bf16.
    prec = (lax.Precision.HIGHEST if w1_ref.dtype == jnp.float32
            else lax.Precision.DEFAULT)

    h1 = jnp.dot(h0.astype(w1_ref.dtype), w1_ref[...],
                 preferred_element_type=jnp.float32, precision=prec) + b1_ref[...]
    h1 = jnp.maximum(h1, 0.0)
    out = jnp.dot(h1.astype(w2_ref.dtype), w2_ref[...],
                  preferred_element_type=jnp.float32, precision=prec) + b2_ref[...]

    out_ref[...] = out.astype(out_ref.dtype)


# --------------------------------------------------------------------------
# One-time parameter layout conversion (hoisted out of the per-call path).
# --------------------------------------------------------------------------
def prepare_params(params, *, weight_dtype=jnp.float32):
    """Transpose Linear weights to (in, out), pad features to 128-multiples.

    weight_dtype=jnp.bfloat16 halves resident-weight VMEM and gives ~3x MXU
    throughput on v6e/v7x (f32 accumulation is kept); default f32 preserves
    the strict 1e-4 tolerance.
    """
    gamma, beta, w1, b1, w2, b2 = params
    d_out, f_in = w1.shape                      # torch Linear weight is (out, in)
    f_pad = _round_up(f_in, _LANE)
    d_pad = _round_up(d_out, _LANE)

    w1_t = jnp.zeros((f_pad, d_pad), weight_dtype).at[:f_in, :d_out].set(
        w1.T.astype(weight_dtype))
    b1_p = jnp.zeros((1, d_pad), jnp.float32).at[0, :d_out].set(b1)
    w2_t = jnp.zeros((d_pad, d_pad), weight_dtype).at[:d_out, :d_out].set(
        w2.T.astype(weight_dtype))
    b2_p = jnp.zeros((1, d_pad), jnp.float32).at[0, :d_out].set(b2)

    return dict(gamma=gamma, beta=beta, w1_t=w1_t, b1=b1_p, w2_t=w2_t, b2=b2_p,
                d_out=int(d_out))


# --------------------------------------------------------------------------
# Wrapper: global BN stats + folded affine, batch-tiled pallas_call.
# --------------------------------------------------------------------------
@functools.partial(jax.jit, static_argnames=("d_out", "tb_hint"))
def _linear_mapping_impl(x0, gamma, beta, w1_t, b1, w2_t, b2, *, d_out, tb_hint):
    B, f_in = x0.shape
    f_pad, d_pad = w1_t.shape
    assert gamma.shape[0] == f_in, (gamma.shape, f_in)

    # ---- BatchNorm training-mode statistics over the FULL batch (global
    # reduction -> wrapper, not the batch-tiled kernel), folded into one
    # per-feature affine:  x_bn = x * scale + shift.
    mean = jnp.mean(x0, axis=0, keepdims=True)                        # (1, F)
    var = jnp.mean(jnp.square(x0 - mean), axis=0, keepdims=True)      # biased
    scale = gamma.reshape(1, -1) / jnp.sqrt(var + EPS)
    shift = beta.reshape(1, -1) - mean * scale
    if f_in == f_pad:
        scale_p = scale.astype(jnp.float32)
        shift_p = shift.astype(jnp.float32)
    else:
        scale_p = jnp.zeros((1, f_pad), jnp.float32).at[:, :f_in].set(scale)
        shift_p = jnp.zeros((1, f_pad), jnp.float32).at[:, :f_in].set(shift)

    # ---- Batch tile size: multiple of 8 sublanes; capped so the grid has at
    # least 2 steps when B allows (keeps both v7x TensorCores busy); shrunk
    # only if the chip-specific VMEM budget would be exceeded.
    phys = _physical_vmem_bytes()
    budget = int(0.75 * phys)                       # ~48 MiB v7x, ~96 MiB v5e/v6e
    x_item = jnp.dtype(x0.dtype).itemsize
    w_item = jnp.dtype(w1_t.dtype).itemsize

    two_step_cap = _round_up(max(_SUBLANE, -(-B // 2)), _SUBLANE)
    tb = min(_round_up(tb_hint, _SUBLANE), two_step_cap, _round_up(B, _SUBLANE))
    while tb > _SUBLANE and _vmem_bytes_estimate(
            tb, f_pad, d_pad, x_itemsize=x_item, w_itemsize=w_item) > budget:
        tb = max(_SUBLANE, _round_up(tb // 2, _SUBLANE))
    # TODO(synk): for very large D where f32 weights alone exceed ~1/4 of VMEM,
    # switch prepare_params(weight_dtype=bf16) or add a K-tiled "arbitrary"
    # grid axis with an f32 accumulator instead of shrinking tb toward 8.

    b_pad = _round_up(B, tb)
    grid = (b_pad // tb,)

    # ---- Input padding: skip entirely when aligned; pad rows only when the
    # feature dim is already a 128-multiple (avoids doubling input HBM traffic).
    if b_pad == B and f_pad == f_in:
        x_p = x0
    elif f_pad == f_in:
        x_p = jnp.pad(x0, ((0, b_pad - B), (0, 0)))
    else:
        x_p = jnp.zeros((b_pad, f_pad), x0.dtype).at[:B, :f_in].set(x0)

    est = _vmem_bytes_estimate(tb, f_pad, d_pad,
                               x_itemsize=x_item, w_itemsize=w_item)
    vmem_limit = int(min(phys - 2 * _MiB, max(32 * _MiB, 2 * est)))

    # Constant-index operands stay resident in a single VMEM buffer (no
    # default double-buffering -> halves resident-weight VMEM).
    resident = dict(pipeline_mode=pl.Buffered(1))

    out_padded = pl.pallas_call(
        _linear_mapping_kernel,
        out_shape=jax.ShapeDtypeStruct((b_pad, d_pad), x0.dtype),
        grid=grid,
        in_specs=[
            pl.BlockSpec((tb, f_pad), lambda i: (i, 0)),                 # x: batch-tiled
            pl.BlockSpec((1, f_pad), lambda i: (0, 0), **resident),      # scale
            pl.BlockSpec((1, f_pad), lambda i: (0, 0), **resident),      # shift
            pl.BlockSpec((f_pad, d_pad), lambda i: (0, 0), **resident),  # w1^T
            pl.BlockSpec((1, d_pad), lambda i: (0, 0), **resident),      # b1
            pl.BlockSpec((d_pad, d_pad), lambda i: (0, 0), **resident),  # w2^T
            pl.BlockSpec((1, d_pad), lambda i: (0, 0), **resident),      # b2
        ],
        out_specs=pl.BlockSpec((tb, d_pad), lambda i: (i, 0)),           # lane-dense out
        compiler_params=pltpu.CompilerParams(
            dimension_semantics=("parallel",),                           # v7x: 2 TCs
            vmem_limit_bytes=vmem_limit,
        ),
    )(x_p, scale_p, shift_p, w1_t, b1, w2_t, b2)

    return out_padded[:B, :d_out]


def linear_mapping(x, prepared, *, tb_hint=512):
    """LinearMapping.forward — the module consumes x[0] of shape (B, 2*D)."""
    x0 = x[0] if isinstance(x, (tuple, list)) else x
    return _linear_mapping_impl(
        x0, prepared["gamma"], prepared["beta"],
        prepared["w1_t"], prepared["b1"], prepared["w2_t"], prepared["b2"],
        d_out=prepared["d_out"], tb_hint=tb_hint)


# --------------------------------------------------------------------------
# Parameter init (PyTorch-default-style) and pure-JAX reference.
# --------------------------------------------------------------------------
def init_params(key, image_embed_dim):
    D = image_embed_dim
    k1, k2, k3, k4 = jax.random.split(key, 4)
    gamma = jnp.ones((2 * D,), jnp.float32)          # BatchNorm1d weight
    beta = jnp.zeros((2 * D,), jnp.float32)          # BatchNorm1d bias
    bound1 = 1.0 / jnp.sqrt(2.0 * D)
    w1 = jax.random.uniform(k1, (D, 2 * D), jnp.float32, -bound1, bound1)
    b1 = jax.random.uniform(k2, (D,), jnp.float32, -bound1, bound1)
    bound2 = 1.0 / jnp.sqrt(1.0 * D)
    w2 = jax.random.uniform(k3, (D, D), jnp.float32, -bound2, bound2)
    b2 = jax.random.uniform(k4, (D,), jnp.float32, -bound2, bound2)
    return gamma, beta, w1, b1, w2, b2


def _reference(x0, params):
    """Pure-JAX mirror of the PyTorch forward (training-mode BN)."""
    gamma, beta, w1, b1, w2, b2 = params
    mean = jnp.mean(x0, axis=0, keepdims=True)
    var = jnp.mean((x0 - mean) ** 2, axis=0, keepdims=True)
    h = (x0 - mean) / jnp.sqrt(var + EPS) * gamma + beta
    h = jnp.maximum(h, 0.0)
    h = jnp.maximum(h @ w1.T + b1, 0.0)
    return h @ w2.T + b2


if __name__ == "__main__":
    B = 8                 # batch
    D = 64                # image_embed_dim; module input feature dim = 2*D = 128

    key = jax.random.PRNGKey(0)
    kx, kp = jax.random.split(key)
    x0 = jax.random.normal(kx, (B, 2 * D), jnp.float32)
    params = init_params(kp, D)
    prepared = prepare_params(params)     # one-time weight layout conversion (f32)

    # The module receives x as a sequence and uses x[0]; emulate that here.
    out = linear_mapping((x0,), prepared)
    out = jax.block_until_ready(out)

    ref = _reference(x0, params)
    assert out.shape == (B, D), out.shape
    assert jnp.allclose(out, ref, atol=1e-4, rtol=1e-4), \
        float(jnp.max(jnp.abs(out - ref)))
    print("KERNEL_OK")
</pallas_src>

<mosaic_0001>
module attributes {stable_mosaic.version = 11 : i64} {
  func.func @_linear_mapping_kernel(%arg0: i32, %arg1: memref<8x128xf32, #tpu.memory_space<vmem>>, %arg2: memref<1x128xf32, #tpu.memory_space<vmem>>, %arg3: memref<1x128xf32, #tpu.memory_space<vmem>>, %arg4: memref<128x128xf32, #tpu.memory_space<vmem>>, %arg5: memref<1x128xf32, #tpu.memory_space<vmem>>, %arg6: memref<128x128xf32, #tpu.memory_space<vmem>>, %arg7: memref<1x128xf32, #tpu.memory_space<vmem>>, %arg8: memref<8x128xf32, #tpu.memory_space<vmem>>) attributes {dimension_semantics = [#tpu.dimension_semantics<parallel>], iteration_bounds = array<i64: 1>, scalar_prefetch = 0 : i64, scratch_operands = 0 : i64, tpu.core_type = #tpu.core_type<tc>, window_params = [{transform_indices = @transform_0, window_bounds = array<i64: 8, 128>}, {pipeline_mode = #tpu.pipeline_mode<synchronous>, transform_indices = @transform_1, window_bounds = array<i64: 1, 128>}, {pipeline_mode = #tpu.pipeline_mode<synchronous>, transform_indices = @transform_2, window_bounds = array<i64: 1, 128>}, {pipeline_mode = #tpu.pipeline_mode<synchronous>, transform_indices = @transform_3, window_bounds = array<i64: 128, 128>}, {pipeline_mode = #tpu.pipeline_mode<synchronous>, transform_indices = @transform_4, window_bounds = array<i64: 1, 128>}, {pipeline_mode = #tpu.pipeline_mode<synchronous>, transform_indices = @transform_5, window_bounds = array<i64: 128, 128>}, {pipeline_mode = #tpu.pipeline_mode<synchronous>, transform_indices = @transform_6, window_bounds = array<i64: 1, 128>}, {transform_indices = @transform_7, window_bounds = array<i64: 8, 128>}]} {
    %c0 = arith.constant 0 : index
    %c0_0 = arith.constant 0 : index
    %0 = vector.load %arg1[%c0, %c0_0] : memref<8x128xf32, #tpu.memory_space<vmem>>, vector<8x128xf32>
    %c0_1 = arith.constant 0 : index
    %c0_2 = arith.constant 0 : index
    %1 = vector.load %arg2[%c0_1, %c0_2] : memref<1x128xf32, #tpu.memory_space<vmem>>, vector<1x128xf32>
    %2 = vector.broadcast %1 : vector<1x128xf32> to vector<8x128xf32>
    %3 = arith.mulf %0, %2 : vector<8x128xf32>
    %c0_3 = arith.constant 0 : index
    %c0_4 = arith.constant 0 : index
    %4 = vector.load %arg3[%c0_3, %c0_4] : memref<1x128xf32, #tpu.memory_space<vmem>>, vector<1x128xf32>
    %5 = vector.broadcast %4 : vector<1x128xf32> to vector<8x128xf32>
    %6 = arith.addf %3, %5 : vector<8x128xf32>
    %cst = arith.constant 0.000000e+00 : f32
    %7 = vector.broadcast %cst : f32 to vector<8x128xf32>
    %8 = arith.maximumf %6, %7 : vector<8x128xf32>
    %c0_5 = arith.constant 0 : index
    %c0_6 = arith.constant 0 : index
    %9 = vector.load %arg4[%c0_5, %c0_6] : memref<128x128xf32, #tpu.memory_space<vmem>>, vector<128x128xf32>
    %cst_7 = arith.constant dense<0.000000e+00> : vector<8x128xf32>
    %10 = tpu.matmul %8, %9, %cst_7 {dimension_numbers = #tpu.dot_dimension_numbers<[1], [0], [0], [1], [0, 0, 1, 1], [], []>, precision = #tpu.contract_precision<fp32>} : vector<8x128xf32>, vector<128x128xf32>, vector<8x128xf32> -> vector<8x128xf32>
    %c0_8 = arith.constant 0 : index
    %c0_9 = arith.constant 0 : index
    %11 = vector.load %arg5[%c0_8, %c0_9] : memref<1x128xf32, #tpu.memory_space<vmem>>, vector<1x128xf32>
    %12 = vector.broadcast %11 : vector<1x128xf32> to vector<8x128xf32>
    %13 = arith.addf %10, %12 : vector<8x128xf32>
    %cst_10 = arith.constant 0.000000e+00 : f32
    %14 = vector.broadcast %cst_10 : f32 to vector<8x128xf32>
    %15 = arith.maximumf %13, %14 : vector<8x128xf32>
    %c0_11 = arith.constant 0 : index
    %c0_12 = arith.constant 0 : index
    %16 = vector.load %arg6[%c0_11, %c0_12] : memref<128x128xf32, #tpu.memory_space<vmem>>, vector<128x128xf32>
    %cst_13 = arith.constant dense<0.000000e+00> : vector<8x128xf32>
    %17 = tpu.matmul %15, %16, %cst_13 {dimension_numbers = #tpu.dot_dimension_numbers<[1], [0], [0], [1], [0, 0, 1, 1], [], []>, precision = #tpu.contract_precision<fp32>} : vector<8x128xf32>, vector<128x128xf32>, vector<8x128xf32> -> vector<8x128xf32>
    %c0_14 = arith.constant 0 : index
    %c0_15 = arith.constant 0 : index
    %18 = vector.load %arg7[%c0_14, %c0_15] : memref<1x128xf32, #tpu.memory_space<vmem>>, vector<1x128xf32>
    %19 = vector.broadcast %18 : vector<1x128xf32> to vector<8x128xf32>
    %20 = arith.addf %17, %19 : vector<8x128xf32>
    %c0_16 = arith.constant 0 : index
    %c0_17 = arith.constant 0 : index
    %21 = vector.load %arg8[%c0_16, %c0_17] : memref<8x128xf32, #tpu.memory_space<vmem>>, vector<8x128xf32>
    tpu.vector_store %arg8[%c0_16, %c0_17], %20 {strides = array<i32>} : memref<8x128xf32, #tpu.memory_space<vmem>>, vector<8x128xf32>,
    return
  }
  func.func @transform_0(%arg0: i32) -> (i32, i32) {
    %c0_i32 = arith.constant 0 : i32
    %c0_i32_0 = arith.constant 0 : i32
    return %arg0, %c0_i32 : i32, i32
  }
  func.func @transform_1(%arg0: i32) -> (i32, i32) {
    %c0_i32 = arith.constant 0 : i32
    %c0_i32_0 = arith.constant 0 : i32
    %c0_i32_1 = arith.constant 0 : i32
    return %c0_i32, %c0_i32_0 : i32, i32
  }
  func.func @transform_2(%arg0: i32) -> (i32, i32) {
    %c0_i32 = arith.constant 0 : i32
    %c0_i32_0 = arith.constant 0 : i32
    %c0_i32_1 = arith.constant 0 : i32
    return %c0_i32, %c0_i32_0 : i32, i32
  }
  func.func @transform_3(%arg0: i32) -> (i32, i32) {
    %c0_i32 = arith.constant 0 : i32
    %c0_i32_0 = arith.constant 0 : i32
    %c0_i32_1 = arith.constant 0 : i32
    return %c0_i32, %c0_i32_0 : i32, i32
  }
  func.func @transform_4(%arg0: i32) -> (i32, i32) {
    %c0_i32 = arith.constant 0 : i32
    %c0_i32_0 = arith.constant 0 : i32
    %c0_i32_1 = arith.constant 0 : i32
    return %c0_i32, %c0_i32_0 : i32, i32
  }
  func.func @transform_5(%arg0: i32) -> (i32, i32) {
    %c0_i32 = arith.constant 0 : i32
    %c0_i32_0 = arith.constant 0 : i32
    %c0_i32_1 = arith.constant 0 : i32
    return %c0_i32, %c0_i32_0 : i32, i32
  }
  func.func @transform_6(%arg0: i32) -> (i32, i32) {
    %c0_i32 = arith.constant 0 : i32
    %c0_i32_0 = arith.constant 0 : i32
    %c0_i32_1 = arith.constant 0 : i32
    return %c0_i32, %c0_i32_0 : i32, i32
  }
  func.func @transform_7(%arg0: i32) -> (i32, i32) {
    %c0_i32 = arith.constant 0 : i32
    %c0_i32_0 = arith.constant 0 : i32
    return %arg0, %c0_i32 : i32, i32
  }
}

</mosaic_0001>

<llo_original>
// kernel: _linear_mapping_impl.1
$region0: #{_linear_mapping_impl.1}
  #allocation0 [shape = 'u32[]', space=smem, size = 0x4, offset = 0x4, fixed_abs, tag = 'smem constant byte address 0x4 - core index']
  #allocation1 [shape = 'u32[72,128]{1,0:T(1,128)}', space=vmem, size = 0x9000, scoped, tag = 'internal scratch']
  %s0 = inlined_call_operand.vmem [shape: f32[8,128], index: 0, kind: input, shape index: {}]
  %s1 = inlined_call_operand.vmem [shape: f32[1,128], index: 1, kind: input, shape index: {}]
  %s2 = inlined_call_operand.vmem [shape: f32[1,128], index: 2, kind: input, shape index: {}]
  %s3 = inlined_call_operand.hbm [shape: f32[128,128], index: 3, kind: input, shape index: {}]
  %s4 = inlined_call_operand.vmem [shape: f32[1,128], index: 4, kind: input, shape index: {}]
  %s5 = inlined_call_operand.hbm [shape: f32[128,128], index: 5, kind: input, shape index: {}]
  %s6 = inlined_call_operand.vmem [shape: f32[1,128], index: 6, kind: input, shape index: {}]
  %s7 = inlined_call_operand.hbm [shape: f32[8,128], index: 7, kind: output, shape index: {}]
  %s8 = sld [smem:[#allocation0]]
  $region46: #{_linear_mapping_impl.1} parent=0
    _
  %s10 = ssub.s32 1, %s8
  %s11 = scalar_select 0, %s10, %s8
  $region1: #{_linear_mapping_impl.1} parent=0
    #allocation2 [shape = 'u8[65536]{0}', space=vmem, size = 0x10000, scoped, tag = 'input window, operand 3, single buffered']
    #allocation3 [shape = 's32[1]{0}', space=sflag, size = 0x4, scoped, tag = 'scoped memory for _linear_mapping_impl.1']
    #allocation4 [shape = 's32[1]{0}', space=sflag, size = 0x4, scoped, tag = 'scoped memory for _linear_mapping_impl.1']
    #allocation5 [shape = 'u8[65536]{0}', space=vmem, size = 0x10000, scoped, tag = 'input window, operand 5, single buffered']
    #allocation6 [shape = 's32[1]{0}', space=sflag, size = 0x4, scoped, tag = 'scoped memory for _linear_mapping_impl.1']
    #allocation7 [shape = 'u8[4096]{0}', space=vmem, size = 0x1000, scoped, tag = 'output window, operand 0, single buffered']
    %12 = vsyncpa [#allocation3], 0
    %13 = vsyncpa [#allocation6], 0
    %14 = vsyncpa [#allocation4], 0
    // Predicated region
    $region2: #{_linear_mapping_impl.1} parent=1 // pred_check
      _
    $region3: #{_linear_mapping_impl.1} parent=1 // pred_check_branch
      %16 = sbr.rel (0) target = $region5
    $region4: #{_linear_mapping_impl.1} parent=1 // pred_region
      _
    $region5: #{_linear_mapping_impl.1} parent=1 // pred_fallthru
      _
    // Predicated region
    $region6: #{_linear_mapping_impl.1} parent=1 // pred_check
      _
    $region7: #{_linear_mapping_impl.1} parent=1 // pred_check_branch
      %18 = sbr.rel (0) target = $region9
    $region8: #{_linear_mapping_impl.1} parent=1 // pred_region
      _
    $region9: #{_linear_mapping_impl.1} parent=1 // pred_fallthru
      _
    // Predicated region
    $region10: #{_linear_mapping_impl.1} parent=1 // pred_check
      _
    $region11: #{_linear_mapping_impl.1} parent=1 // pred_check_branch
      %20 = sbr.rel (0) target = $region13
    $region12: #{_linear_mapping_impl.1} parent=1 // pred_region
      _
    $region13: #{_linear_mapping_impl.1} parent=1 // pred_fallthru
      _
    // Predicated region
    $region14: #{_linear_mapping_impl.1} parent=1 // pred_check
      _
    $region15: #{_linear_mapping_impl.1} parent=1 // pred_check_branch
      %22 = sbr.rel (0) target = $region17
    $region16: #{_linear_mapping_impl.1} parent=1 // pred_region
      %24 = vsyncadd [#allocation3], 0
      %s25 = sshll.u32 %s3, 4
      %s26 = int_to_ptr.hbm [resolvable:$true] %s25
      %s27 = sshll.u32 [#allocation2], 4
      %s28 = int_to_ptr.vmem [resolvable:$true] %s27
      %33 = dma.hbm_to_vmem [thread:$0]  %s26, 2048, %s28, [#allocation3], 128, 128, 8
    $region17: #{_linear_mapping_impl.1} parent=1 // pred_fallthru
      _
    // Predicated region
    $region18: #{_linear_mapping_impl.1} parent=1 // pred_check
      _
    $region19: #{_linear_mapping_impl.1} parent=1 // pred_check_branch
      %35 = sbr.rel (0) target = $region21
    $region20: #{_linear_mapping_impl.1} parent=1 // pred_region
      _
    $region21: #{_linear_mapping_impl.1} parent=1 // pred_fallthru
      _
    // Predicated region
    $region22: #{_linear_mapping_impl.1} parent=1 // pred_check
      _
    $region23: #{_linear_mapping_impl.1} parent=1 // pred_check_branch
      %37 = sbr.rel (0) target = $region25
    $region24: #{_linear_mapping_impl.1} parent=1 // pred_region
      %39 = vsyncadd [#allocation6], 0
      %s40 = sshll.u32 %s5, 4
      %s41 = int_to_ptr.hbm [resolvable:$true] %s40
      %s42 = sshll.u32 [#allocation5], 4
      %s43 = int_to_ptr.vmem [resolvable:$true] %s42
      %48 = dma.hbm_to_vmem [thread:$0]  %s41, 2048, %s43, [#allocation6], 128, 128, 8
    $region25: #{_linear_mapping_impl.1} parent=1 // pred_fallthru
      _
    // Predicated region
    $region26: #{_linear_mapping_impl.1} parent=1 // pred_check
      _
    $region27: #{_linear_mapping_impl.1} parent=1 // pred_check_branch
      %50 = sbr.rel (0) target = $region29
    $region28: #{_linear_mapping_impl.1} parent=1 // pred_region
      _
    $region29: #{_linear_mapping_impl.1} parent=1 // pred_fallthru
      _
    // Predicated region
    $region30: #{_linear_mapping_impl.1} parent=1 // pred_check
      _
    $region31: #{_linear_mapping_impl.1} parent=1 // pred_check_branch
      %52 = sbr.rel (0) target = $region33
    $region32: #{_linear_mapping_impl.1} parent=1 // pred_region
      %54 = dma.done [#allocation3], 2048
    $region33: #{_linear_mapping_impl.1} parent=1 // pred_fallthru
      _
    // Predicated region
    $region34: #{_linear_mapping_impl.1} parent=1 // pred_check
      _
    $region35: #{_linear_mapping_impl.1} parent=1 // pred_check_branch
      %56 = sbr.rel (0) target = $region37
    $region36: #{_linear_mapping_impl.1} parent=1 // pred_region
      %58 = dma.done [#allocation6], 2048
    $region37: #{_linear_mapping_impl.1} parent=1 // pred_fallthru
      _
    %v59 = vld [vmem:[%s0] sm:$0xff]
    %v60 = vld [vmem:[%s1] sm:$0x1]
    %v62 = vperm.slane %v60, 0
    %v64 = vmul.f32 %v59, %v62
    %v65 = vld [vmem:[%s2] sm:$0x1]
    %v67 = vperm.slane %v65, 0
    %v69 = vadd.f32 %v64, %v67
    %v70 = vmax.f32 %v69, 0.0
    %v71 = vld [vmem:[#allocation2] sm:$0xff]
    %v72 = vld [vmem:[#allocation2 + $0x8] sm:$0xff]
    %v73 = vld [vmem:[#allocation2 + $0x10] sm:$0xff]
    %v74 = vld [vmem:[#allocation2 + $0x18] sm:$0xff]
    %v75 = vld [vmem:[#allocation2 + $0x20] sm:$0xff]
    %v76 = vld [vmem:[#allocation2 + $0x28] sm:$0xff]
    %v77 = vld [vmem:[#allocation2 + $0x30] sm:$0xff]
    %v78 = vld [vmem:[#allocation2 + $0x38] sm:$0xff]
    %v79 = vld [vmem:[#allocation2 + $0x40] sm:$0xff]
    %v80 = vld [vmem:[#allocation2 + $0x48] sm:$0xff]
    %v81 = vld [vmem:[#allocation2 + $0x50] sm:$0xff]
    %v82 = vld [vmem:[#allocation2 + $0x58] sm:$0xff]
    %v83 = vld [vmem:[#allocation2 + $0x60] sm:$0xff]
    %v84 = vld [vmem:[#allocation2 + $0x68] sm:$0xff]
    %v85 = vld [vmem:[#allocation2 + $0x70] sm:$0xff]
    %v86 = vld [vmem:[#allocation2 + $0x78] sm:$0xff]
    %v87 = vld [vmem:[%s4] sm:$0x1]
    %v89 = vperm.slane %v87, 0
    %v91 = vand.u32 %v86, 4294901760
    %92 = vmatpush.msra.mxu0 %v91
    %v93 = vand.u32 %v85, 4294901760
    %94 = vmatpush.msra.mxu0 %v93
    %v95 = vand.u32 %v84, 4294901760
    %96 = vmatpush.msra.mxu0 %v95
    %v97 = vand.u32 %v83, 4294901760
    %98 = vmatpush.msra.mxu0 %v97
    %v99 = vand.u32 %v82, 4294901760
    %100 = vmatpush.msra.mxu0 %v99
    %v101 = vand.u32 %v81, 4294901760
    %102 = vmatpush.msra.mxu0 %v101
    %v103 = vand.u32 %v80, 4294901760
    %104 = vmatpush.msra.mxu0 %v103
    %v105 = vand.u32 %v79, 4294901760
    %106 = vmatpush.msra.mxu0 %v105
    %v107 = vand.u32 %v78, 4294901760
    %108 = vmatpush.msra.mxu0 %v107
    %v109 = vand.u32 %v77, 4294901760
    %110 = vmatpush.msra.mxu0 %v109
    %v111 = vand.u32 %v76, 4294901760
    %112 = vmatpush.msra.mxu0 %v111
    %v113 = vand.u32 %v75, 4294901760
    %114 = vmatpush.msra.mxu0 %v113
    %v115 = vand.u32 %v74, 4294901760
    %116 = vmatpush.msra.mxu0 %v115
    %v117 = vand.u32 %v73, 4294901760
    %118 = vmatpush.msra.mxu0 %v117
    %v119 = vand.u32 %v72, 4294901760
    %120 = vmatpush.msra.mxu0 %v119
    %v121 = vand.u32 %v71, 4294901760
    %122 = vmatpush.msra.mxu0 %v121
    %v123 = vand.u32 %v70, 4294901760
    %v124 = vsub.f32 %v70, %v123
    %v125 = vand.u32 %v124, 4294901760
    %v126 = vsub.f32 %v124, %v125
    %v127 = vand.u32 %v126, 4294901760
    %128 = vmatmul.f32.gmra.mxu0 %v127
    %v129 = vpop.f32.mrf.mxu0
    %v130 = vadd.f32 %v89, %v129
    %131 = vdwg.mxu0
    %v132 = vand.u32 %v86, 4294901760
    %v133 = vsub.f32 %v86, %v132
    %v134 = vand.u32 %v133, 4294901760
    %v135 = vsub.f32 %v133, %v134
    %v136 = vand.u32 %v135, 4294901760
    %137 = vmatpush.msra.mxu0 %v136
    %v138 = vand.u32 %v85, 4294901760
    %v139 = vsub.f32 %v85, %v138
    %v140 = vand.u32 %v139, 4294901760
    %v141 = vsub.f32 %v139, %v140
    %v142 = vand.u32 %v141, 4294901760
    %143 = vmatpush.msra.mxu0 %v142
    %v144 = vand.u32 %v84, 4294901760
    %v145 = vsub.f32 %v84, %v144
    %v146 = vand.u32 %v145, 4294901760
    %v147 = vsub.f32 %v145, %v146
    %v148 = vand.u32 %v147, 4294901760
    %149 = vmatpush.msra.mxu0 %v148
    %v150 = vand.u32 %v83, 4294901760
    %v151 = vsub.f32 %v83, %v150
    %v152 = vand.u32 %v151, 4294901760
    %v153 = vsub.f32 %v151, %v152
    %v154 = vand.u32 %v153, 4294901760
    %155 = vmatpush.msra.mxu0 %v154
    %v156 = vand.u32 %v82, 4294901760
    %v157 = vsub.f32 %v82, %v156
    %v158 = vand.u32 %v157, 4294901760
    %v159 = vsub.f32 %v157, %v158
    %v160 = vand.u32 %v159, 4294901760
    %161 = vmatpush.msra.mxu0 %v160
    %v162 = vand.u32 %v81, 4294901760
    %v163 = vsub.f32 %v81, %v162
    %v164 = vand.u32 %v163, 4294901760
    %v165 = vsub.f32 %v163, %v164
    %v166 = vand.u32 %v165, 4294901760
    %167 = vmatpush.msra.mxu0 %v166
    %v168 = vand.u32 %v80, 4294901760
    %v169 = vsub.f32 %v80, %v168
    %v170 = vand.u32 %v169, 4294901760
    %v171 = vsub.f32 %v169, %v170
    %v172 = vand.u32 %v171, 4294901760
    %173 = vmatpush.msra.mxu0 %v172
    %v174 = vand.u32 %v79, 4294901760
    %v175 = vsub.f32 %v79, %v174
    %v176 = vand.u32 %v175, 4294901760
    %v177 = vsub.f32 %v175, %v176
    %v178 = vand.u32 %v177, 4294901760
    %179 = vmatpush.msra.mxu0 %v178
    %v180 = vand.u32 %v78, 4294901760
    %v181 = vsub.f32 %v78, %v180
    %v182 = vand.u32 %v181, 4294901760
    %v183 = vsub.f32 %v181, %v182
    %v184 = vand.u32 %v183, 4294901760
    %185 = vmatpush.msra.mxu0 %v184
    %v186 = vand.u32 %v77, 4294901760
    %v187 = vsub.f32 %v77, %v186
    %v188 = vand.u32 %v187, 4294901760
    %v189 = vsub.f32 %v187, %v188
    %v190 = vand.u32 %v189, 4294901760
    %191 = vmatpush.msra.mxu0 %v190
    %v192 = vand.u32 %v76, 4294901760
    %v193 = vsub.f32 %v76, %v192
    %v194 = vand.u32 %v193, 4294901760
    %v195 = vsub.f32 %v193, %v194
    %v196 = vand.u32 %v195, 4294901760
    %197 = vmatpush.msra.mxu0 %v196
    %v198 = vand.u32 %v75, 4294901760
    %v199 = vsub.f32 %v75, %v198
    %v200 = vand.u32 %v199, 4294901760
    %v201 = vsub.f32 %v199, %v200
    %v202 = vand.u32 %v201, 4294901760
    %203 = vmatpush.msra.mxu0 %v202
    %v204 = vand.u32 %v74, 4294901760
    %v205 = vsub.f32 %v74, %v204
    %v206 = vand.u32 %v205, 4294901760
    %v207 = vsub.f32 %v205, %v206
    %v208 = vand.u32 %v207, 4294901760
    %209 = vmatpush.msra.mxu0 %v208
    %v210 = vand.u32 %v73, 4294901760
    %v211 = vsub.f32 %v73, %v210
    %v212 = vand.u32 %v211, 4294901760
    %v213 = vsub.f32 %v211, %v212
    %v214 = vand.u32 %v213, 4294901760
    %215 = vmatpush.msra.mxu0 %v214
    %v216 = vand.u32 %v72, 4294901760
    %v217 = vsub.f32 %v72, %v216
    %v218 = vand.u32 %v217, 4294901760
    %v219 = vsub.f32 %v217, %v218
    %v220 = vand.u32 %v219, 4294901760
    %221 = vmatpush.msra.mxu0 %v220
    %v222 = vand.u32 %v71, 4294901760
    %v223 = vsub.f32 %v71, %v222
    %v224 = vand.u32 %v223, 4294901760
    %v225 = vsub.f32 %v223, %v224
    %v226 = vand.u32 %v225, 4294901760
    %227 = vmatpush.msra.mxu0 %v226
    %v228 = vand.u32 %v70, 4294901760
    %229 = vmatmul.f32.gmra.mxu0 %v228
    %v230 = vpop.f32.mrf.mxu0
    %v231 = vadd.f32 %v130, %v230
    %232 = vdwg.mxu0
    %v233 = vand.u32 %v86, 4294901760
    %v234 = vsub.f32 %v86, %v233
    %235 = vmatpush.msra.mxu0 %v234
    %v236 = vand.u32 %v85, 4294901760
    %v237 = vsub.f32 %v85, %v236
    %238 = vmatpush.msra.mxu0 %v237
    %v239 = vand.u32 %v84, 4294901760
    %v240 = vsub.f32 %v84, %v239
    %241 = vmatpush.msra.mxu0 %v240
    %v242 = vand.u32 %v83, 4294901760
    %v243 = vsub.f32 %v83, %v242
    %244 = vmatpush.msra.mxu0 %v243
    %v245 = vand.u32 %v82, 4294901760
    %v246 = vsub.f32 %v82, %v245
    %247 = vmatpush.msra.mxu0 %v246
    %v248 = vand.u32 %v81, 4294901760
    %v249 = vsub.f32 %v81, %v248
    %250 = vmatpush.msra.mxu0 %v249
    %v251 = vand.u32 %v80, 4294901760
    %v252 = vsub.f32 %v80, %v251
    %253 = vmatpush.msra.mxu0 %v252
    %v254 = vand.u32 %v79, 4294901760
    %v255 = vsub.f32 %v79, %v254
    %256 = vmatpush.msra.mxu0 %v255
    %v257 = vand.u32 %v78, 4294901760
    %v258 = vsub.f32 %v78, %v257
    %259 = vmatpush.msra.mxu0 %v258
    %v260 = vand.u32 %v77, 4294901760
    %v261 = vsub.f32 %v77, %v260
    %262 = vmatpush.msra.mxu0 %v261
    %v263 = vand.u32 %v76, 4294901760
    %v264 = vsub.f32 %v76, %v263
    %265 = vmatpush.msra.mxu0 %v264
    %v266 = vand.u32 %v75, 4294901760
    %v267 = vsub.f32 %v75, %v266
    %268 = vmatpush.msra.mxu0 %v267
    %v269 = vand.u32 %v74, 4294901760
    %v270 = vsub.f32 %v74, %v269
    %271 = vmatpush.msra.mxu0 %v270
    %v272 = vand.u32 %v73, 4294901760
    %v273 = vsub.f32 %v73, %v272
    %274 = vmatpush.msra.mxu0 %v273
    %v275 = vand.u32 %v72, 4294901760
    %v276 = vsub.f32 %v72, %v275
    %277 = vmatpush.msra.mxu0 %v276
    %v278 = vand.u32 %v71, 4294901760
    %v279 = vsub.f32 %v71, %v278
    %280 = vmatpush.msra.mxu0 %v279
    %v281 = vand.u32 %v70, 4294901760
    %v282 = vsub.f32 %v70, %v281
    %283 = vmatmul.f32.gmra.mxu0 %v282
    %v284 = vpop.f32.mrf.mxu0
    %v285 = vadd.f32 %v231, %v284
    %286 = vdwg.mxu0
    %v287 = vand.u32 %v86, 4294901760
    %288 = vmatpush.msra.mxu0 %v287
    %v289 = vand.u32 %v85, 4294901760
    %290 = vmatpush.msra.mxu0 %v289
    %v291 = vand.u32 %v84, 4294901760
    %292 = vmatpush.msra.mxu0 %v291
    %v293 = vand.u32 %v83, 4294901760
    %294 = vmatpush.msra.mxu0 %v293
    %v295 = vand.u32 %v82, 4294901760
    %296 = vmatpush.msra.mxu0 %v295
    %v297 = vand.u32 %v81, 4294901760
    %298 = vmatpush.msra.mxu0 %v297
    %v299 = vand.u32 %v80, 4294901760
    %300 = vmatpush.msra.mxu0 %v299
    %v301 = vand.u32 %v79, 4294901760
    %302 = vmatpush.msra.mxu0 %v301
    %v303 = vand.u32 %v78, 4294901760
    %304 = vmatpush.msra.mxu0 %v303
    %v305 = vand.u32 %v77, 4294901760
    %306 = vmatpush.msra.mxu0 %v305
    %v307 = vand.u32 %v76, 4294901760
    %308 = vmatpush.msra.mxu0 %v307
    %v309 = vand.u32 %v75, 4294901760
    %310 = vmatpush.msra.mxu0 %v309
    %v311 = vand.u32 %v74, 4294901760
    %312 = vmatpush.msra.mxu0 %v311
    %v313 = vand.u32 %v73, 4294901760
    %314 = vmatpush.msra.mxu0 %v313
    %v315 = vand.u32 %v72, 4294901760
    %316 = vmatpush.msra.mxu0 %v315
    %v317 = vand.u32 %v71, 4294901760
    %318 = vmatpush.msra.mxu0 %v317
    %v319 = vand.u32 %v70, 4294901760
    %v320 = vsub.f32 %v70, %v319
    %v321 = vand.u32 %v320, 4294901760
    %322 = vmatmul.f32.gmra.mxu0 %v321
    %v323 = vpop.f32.mrf.mxu0
    %v324 = vadd.f32 %v285, %v323
    %325 = vdwg.mxu0
    %v326 = vand.u32 %v86, 4294901760
    %v327 = vsub.f32 %v86, %v326
    %v328 = vand.u32 %v327, 4294901760
    %329 = vmatpush.msra.mxu0 %v328
    %v330 = vand.u32 %v85, 4294901760
    %v331 = vsub.f32 %v85, %v330
    %v332 = vand.u32 %v331, 4294901760
    %333 = vmatpush.msra.mxu0 %v332
    %v334 = vand.u32 %v84, 4294901760
    %v335 = vsub.f32 %v84, %v334
    %v336 = vand.u32 %v335, 4294901760
    %337 = vmatpush.msra.mxu0 %v336
    %v338 = vand.u32 %v83, 4294901760
    %v339 = vsub.f32 %v83, %v338
    %v340 = vand.u32 %v339, 4294901760
    %341 = vmatpush.msra.mxu0 %v340
    %v342 = vand.u32 %v82, 4294901760
    %v343 = vsub.f32 %v82, %v342
    %v344 = vand.u32 %v343, 4294901760
    %345 = vmatpush.msra.mxu0 %v344
    %v346 = vand.u32 %v81, 4294901760
    %v347 = vsub.f32 %v81, %v346
    %v348 = vand.u32 %v347, 4294901760
    %349 = vmatpush.msra.mxu0 %v348
    %v350 = vand.u32 %v80, 4294901760
    %v351 = vsub.f32 %v80, %v350
    %v352 = vand.u32 %v351, 4294901760
    %353 = vmatpush.msra.mxu0 %v352
    %v354 = vand.u32 %v79, 4294901760
    %v355 = vsub.f32 %v79, %v354
    %v356 = vand.u32 %v355, 4294901760
    %357 = vmatpush.msra.mxu0 %v356
    %v358 = vand.u32 %v78, 4294901760
    %v359 = vsub.f32 %v78, %v358
    %v360 = vand.u32 %v359, 4294901760
    %361 = vmatpush.msra.mxu0 %v360
    %v362 = vand.u32 %v77, 4294901760
    %v363 = vsub.f32 %v77, %v362
    %v364 = vand.u32 %v363, 4294901760
    %365 = vmatpush.msra.mxu0 %v364
    %v366 = vand.u32 %v76, 4294901760
    %v367 = vsub.f32 %v76, %v366
    %v368 = vand.u32 %v367, 4294901760
    %369 = vmatpush.msra.mxu0 %v368
    %v370 = vand.u32 %v75, 4294901760
    %v371 = vsub.f32 %v75, %v370
    %v372 = vand.u32 %v371, 4294901760
    %373 = vmatpush.msra.mxu0 %v372
    %v374 = vand.u32 %v74, 4294901760
    %v375 = vsub.f32 %v74, %v374
    %v376 = vand.u32 %v375, 4294901760
    %377 = vmatpush.msra.mxu0 %v376
    %v378 = vand.u32 %v73, 4294901760
    %v379 = vsub.f32 %v73, %v378
    %v380 = vand.u32 %v379, 4294901760
    %381 = vmatpush.msra.mxu0 %v380
    %v382 = vand.u32 %v72, 4294901760
    %v383 = vsub.f32 %v72, %v382
    %v384 = vand.u32 %v383, 4294901760
    %385 = vmatpush.msra.mxu0 %v384
    %v386 = vand.u32 %v71, 4294901760
    %v387 = vsub.f32 %v71, %v386
    %v388 = vand.u32 %v387, 4294901760
    %389 = vmatpush.msra.mxu0 %v388
    %v390 = vand.u32 %v70, 4294901760
    %391 = vmatmul.f32.gmra.mxu0 %v390
    %v392 = vpop.f32.mrf.mxu0
    %v393 = vadd.f32 %v324, %v392
    %394 = vdwg.mxu0
    %v395 = vand.u32 %v86, 4294901760
    %396 = vmatpush.msra.mxu0 %v395
    %v397 = vand.u32 %v85, 4294901760
    %398 = vmatpush.msra.mxu0 %v397
    %v399 = vand.u32 %v84, 4294901760
    %400 = vmatpush.msra.mxu0 %v399
    %v401 = vand.u32 %v83, 4294901760
    %402 = vmatpush.msra.mxu0 %v401
    %v403 = vand.u32 %v82, 4294901760
    %404 = vmatpush.msra.mxu0 %v403
    %v405 = vand.u32 %v81, 4294901760
    %406 = vmatpush.msra.mxu0 %v405
    %v407 = vand.u32 %v80, 4294901760
    %408 = vmatpush.msra.mxu0 %v407
    %v409 = vand.u32 %v79, 4294901760
    %410 = vmatpush.msra.mxu0 %v409
    %v411 = vand.u32 %v78, 4294901760
    %412 = vmatpush.msra.mxu0 %v411
    %v413 = vand.u32 %v77, 4294901760
    %414 = vmatpush.msra.mxu0 %v413
    %v415 = vand.u32 %v76, 4294901760
    %416 = vmatpush.msra.mxu0 %v415
    %v417 = vand.u32 %v75, 4294901760
    %418 = vmatpush.msra.mxu0 %v417
    %v419 = vand.u32 %v74, 4294901760
    %420 = vmatpush.msra.mxu0 %v419
    %v421 = vand.u32 %v73, 4294901760
    %422 = vmatpush.msra.mxu0 %v421
    %v423 = vand.u32 %v72, 4294901760
    %424 = vmatpush.msra.mxu0 %v423
    %v425 = vand.u32 %v71, 4294901760
    %426 = vmatpush.msra.mxu0 %v425
    %v427 = vand.u32 %v70, 4294901760
    %428 = vmatmul.f32.gmra.mxu0 %v427
    %v429 = vpop.f32.mrf.mxu0
    %v430 = vadd.f32 %v393, %v429
    %431 = vdwg.mxu0
    %v432 = vmax.f32 %v430, 0.0
    %v433 = vld [vmem:[#allocation5] sm:$0xff]
    %v434 = vld [vmem:[#allocation5 + $0x8] sm:$0xff]
    %v435 = vld [vmem:[#allocation5 + $0x10] sm:$0xff]
    %v436 = vld [vmem:[#allocation5 + $0x18] sm:$0xff]
    %v437 = vld [vmem:[#allocation5 + $0x20] sm:$0xff]
    %v438 = vld [vmem:[#allocation5 + $0x28] sm:$0xff]
    %v439 = vld [vmem:[#allocation5 + $0x30] sm:$0xff]
    %v440 = vld [vmem:[#allocation5 + $0x38] sm:$0xff]
    %v441 = vld [vmem:[#allocation5 + $0x40] sm:$0xff]
    %v442 = vld [vmem:[#allocation5 + $0x48] sm:$0xff]
    %v443 = vld [vmem:[#allocation5 + $0x50] sm:$0xff]
    %v444 = vld [vmem:[#allocation5 + $0x58] sm:$0xff]
    %v445 = vld [vmem:[#allocation5 + $0x60] sm:$0xff]
    %v446 = vld [vmem:[#allocation5 + $0x68] sm:$0xff]
    %v447 = vld [vmem:[#allocation5 + $0x70] sm:$0xff]
    %v448 = vld [vmem:[#allocation5 + $0x78] sm:$0xff]
    %v449 = vld [vmem:[%s6] sm:$0x1]
    %v451 = vperm.slane %v449, 0
    %v453 = vand.u32 %v448, 4294901760
    %454 = vmatpush.msra.mxu0 %v453
    %v455 = vand.u32 %v447, 4294901760
    %456 = vmatpush.msra.mxu0 %v455
    %v457 = vand.u32 %v446, 4294901760
    %458 = vmatpush.msra.mxu0 %v457
    %v459 = vand.u32 %v445, 4294901760
    %460 = vmatpush.msra.mxu0 %v459
    %v461 = vand.u32 %v444, 4294901760
    %462 = vmatpush.msra.mxu0 %v461
    %v463 = vand.u32 %v443, 4294901760
    %464 = vmatpush.msra.mxu0 %v463
    %v465 = vand.u32 %v442, 4294901760
    %466 = vmatpush.msra.mxu0 %v465
    %v467 = vand.u32 %v441, 4294901760
    %468 = vmatpush.msra.mxu0 %v467
    %v469 = vand.u32 %v440, 4294901760
    %470 = vmatpush.msra.mxu0 %v469
    %v471 = vand.u32 %v439, 4294901760
    %472 = vmatpush.msra.mxu0 %v471
    %v473 = vand.u32 %v438, 4294901760
    %474 = vmatpush.msra.mxu0 %v473
    %v475 = vand.u32 %v437, 4294901760
    %476 = vmatpush.msra.mxu0 %v475
    %v477 = vand.u32 %v436, 4294901760
    %478 = vmatpush.msra.mxu0 %v477
    %v479 = vand.u32 %v435, 4294901760
    %480 = vmatpush.msra.mxu0 %v479
    %v481 = vand.u32 %v434, 4294901760
    %482 = vmatpush.msra.mxu0 %v481
    %v483 = vand.u32 %v433, 4294901760
    %484 = vmatpush.msra.mxu0 %v483
    %v485 = vand.u32 %v432, 4294901760
    %v486 = vsub.f32 %v432, %v485
    %v487 = vand.u32 %v486, 4294901760
    %v488 = vsub.f32 %v486, %v487
    %v489 = vand.u32 %v488, 4294901760
    %490 = vmatmul.f32.gmra.mxu0 %v489
    %v491 = vpop.f32.mrf.mxu0
    %v492 = vadd.f32 %v451, %v491
    %493 = vdwg.mxu0
    %v494 = vand.u32 %v448, 4294901760
    %v495 = vsub.f32 %v448, %v494
    %v496 = vand.u32 %v495, 4294901760
    %v497 = vsub.f32 %v495, %v496
    %v498 = vand.u32 %v497, 4294901760
    %499 = vmatpush.msra.mxu0 %v498
    %v500 = vand.u32 %v447, 4294901760
    %v501 = vsub.f32 %v447, %v500
    %v502 = vand.u32 %v501, 4294901760
    %v503 = vsub.f32 %v501, %v502
    %v504 = vand.u32 %v503, 4294901760
    %505 = vmatpush.msra.mxu0 %v504
    %v506 = vand.u32 %v446, 4294901760
    %v507 = vsub.f32 %v446, %v506
    %v508 = vand.u32 %v507, 4294901760
    %v509 = vsub.f32 %v507, %v508
    %v510 = vand.u32 %v509, 4294901760
    %511 = vmatpush.msra.mxu0 %v510
    %v512 = vand.u32 %v445, 4294901760
    %v513 = vsub.f32 %v445, %v512
    %v514 = vand.u32 %v513, 4294901760
    %v515 = vsub.f32 %v513, %v514
    %v516 = vand.u32 %v515, 4294901760
    %517 = vmatpush.msra.mxu0 %v516
    %v518 = vand.u32 %v444, 4294901760
    %v519 = vsub.f32 %v444, %v518
    %v520 = vand.u32 %v519, 4294901760
    %v521 = vsub.f32 %v519, %v520
    %v522 = vand.u32 %v521, 4294901760
    %523 = vmatpush.msra.mxu0 %v522
    %v524 = vand.u32 %v443, 4294901760
    %v525 = vsub.f32 %v443, %v524
    %v526 = vand.u32 %v525, 4294901760
    %v527 = vsub.f32 %v525, %v526
    %v528 = vand.u32 %v527, 4294901760
    %529 = vmatpush.msra.mxu0 %v528
    %v530 = vand.u32 %v442, 4294901760
    %v531 = vsub.f32 %v442, %v530
    %v532 = vand.u32 %v531, 4294901760
    %v533 = vsub.f32 %v531, %v532
    %v534 = vand.u32 %v533, 4294901760
    %535 = vmatpush.msra.mxu0 %v534
    %v536 = vand.u32 %v441, 4294901760
    %v537 = vsub.f32 %v441, %v536
    %v538 = vand.u32 %v537, 4294901760
    %v539 = vsub.f32 %v537, %v538
    %v540 = vand.u32 %v539, 4294901760
    %541 = vmatpush.msra.mxu0 %v540
    %v542 = vand.u32 %v440, 4294901760
    %v543 = vsub.f32 %v440, %v542
    %v544 = vand.u32 %v543, 4294901760
    %v545 = vsub.f32 %v543, %v544
    %v546 = vand.u32 %v545, 4294901760
    %547 = vmatpush.msra.mxu0 %v546
    %v548 = vand.u32 %v439, 4294901760
    %v549 = vsub.f32 %v439, %v548
    %v550 = vand.u32 %v549, 4294901760
    %v551 = vsub.f32 %v549, %v550
    %v552 = vand.u32 %v551, 4294901760
    %553 = vmatpush.msra.mxu0 %v552
    %v554 = vand.u32 %v438, 4294901760
    %v555 = vsub.f32 %v438, %v554
    %v556 = vand.u32 %v555, 4294901760
    %v557 = vsub.f32 %v555, %v556
    %v558 = vand.u32 %v557, 4294901760
    %559 = vmatpush.msra.mxu0 %v558
    %v560 = vand.u32 %v437, 4294901760
    %v561 = vsub.f32 %v437, %v560
    %v562 = vand.u32 %v561, 4294901760
    %v563 = vsub.f32 %v561, %v562
    %v564 = vand.u32 %v563, 4294901760
    %565 = vmatpush.msra.mxu0 %v564
    %v566 = vand.u32 %v436, 4294901760
    %v567 = vsub.f32 %v436, %v566
    %v568 = vand.u32 %v567, 4294901760
    %v569 = vsub.f32 %v567, %v568
    %v570 = vand.u32 %v569, 4294901760
    %571 = vmatpush.msra.mxu0 %v570
    %v572 = vand.u32 %v435, 4294901760
    %v573 = vsub.f32 %v435, %v572
    %v574 = vand.u32 %v573, 4294901760
    %v575 = vsub.f32 %v573, %v574
    %v576 = vand.u32 %v575, 4294901760
    %577 = vmatpush.msra.mxu0 %v576
    %v578 = vand.u32 %v434, 4294901760
    %v579 = vsub.f32 %v434, %v578
    %v580 = vand.u32 %v579, 4294901760
    %v581 = vsub.f32 %v579, %v580
    %v582 = vand.u32 %v581, 4294901760
    %583 = vmatpush.msra.mxu0 %v582
    %v584 = vand.u32 %v433, 4294901760
    %v585 = vsub.f32 %v433, %v584
    %v586 = vand.u32 %v585, 4294901760
    %v587 = vsub.f32 %v585, %v586
    %v588 = vand.u32 %v587, 4294901760
    %589 = vmatpush.msra.mxu0 %v588
    %v590 = vand.u32 %v432, 4294901760
    %591 = vmatmul.f32.gmra.mxu0 %v590
    %v592 = vpop.f32.mrf.mxu0
    %v593 = vadd.f32 %v492, %v592
    %594 = vdwg.mxu0
    %v595 = vand.u32 %v448, 4294901760
    %v596 = vsub.f32 %v448, %v595
    %597 = vmatpush.msra.mxu0 %v596
    %v598 = vand.u32 %v447, 4294901760
    %v599 = vsub.f32 %v447, %v598
    %600 = vmatpush.msra.mxu0 %v599
    %v601 = vand.u32 %v446, 4294901760
    %v602 = vsub.f32 %v446, %v601
    %603 = vmatpush.msra.mxu0 %v602
    %v604 = vand.u32 %v445, 4294901760
    %v605 = vsub.f32 %v445, %v604
    %606 = vmatpush.msra.mxu0 %v605
    %v607 = vand.u32 %v444, 4294901760
    %v608 = vsub.f32 %v444, %v607
    %609 = vmatpush.msra.mxu0 %v608
    %v610 = vand.u32 %v443, 4294901760
    %v611 = vsub.f32 %v443, %v610
    %612 = vmatpush.msra.mxu0 %v611
    %v613 = vand.u32 %v442, 4294901760
    %v614 = vsub.f32 %v442, %v613
    %615 = vmatpush.msra.mxu0 %v614
    %v616 = vand.u32 %v441, 4294901760
    %v617 = vsub.f32 %v441, %v616
    %618 = vmatpush.msra.mxu0 %v617
    %v619 = vand.u32 %v440, 4294901760
    %v620 = vsub.f32 %v440, %v619
    %621 = vmatpush.msra.mxu0 %v620
    %v622 = vand.u32 %v439, 4294901760
    %v623 = vsub.f32 %v439, %v622
    %624 = vmatpush.msra.mxu0 %v623
    %v625 = vand.u32 %v438, 4294901760
    %v626 = vsub.f32 %v438, %v625
    %627 = vmatpush.msra.mxu0 %v626
    %v628 = vand.u32 %v437, 4294901760
    %v629 = vsub.f32 %v437, %v628
    %630 = vmatpush.msra.mxu0 %v629
    %v631 = vand.u32 %v436, 4294901760
    %v632 = vsub.f32 %v436, %v631
    %633 = vmatpush.msra.mxu0 %v632
    %v634 = vand.u32 %v435, 4294901760
    %v635 = vsub.f32 %v435, %v634
    %636 = vmatpush.msra.mxu0 %v635
    %v637 = vand.u32 %v434, 4294901760
    %v638 = vsub.f32 %v434, %v637
    %639 = vmatpush.msra.mxu0 %v638
    %v640 = vand.u32 %v433, 4294901760
    %v641 = vsub.f32 %v433, %v640
    %642 = vmatpush.msra.mxu0 %v641
    %v643 = vand.u32 %v432, 4294901760
    %v644 = vsub.f32 %v432, %v643
    %645 = vmatmul.f32.gmra.mxu0 %v644
    %v646 = vpop.f32.mrf.mxu0
    %v647 = vadd.f32 %v593, %v646
    %648 = vdwg.mxu0
    %v649 = vand.u32 %v448, 4294901760
    %650 = vmatpush.msra.mxu0 %v649
    %v651 = vand.u32 %v447, 4294901760
    %652 = vmatpush.msra.mxu0 %v651
    %v653 = vand.u32 %v446, 4294901760
    %654 = vmatpush.msra.mxu0 %v653
    %v655 = vand.u32 %v445, 4294901760
    %656 = vmatpush.msra.mxu0 %v655
    %v657 = vand.u32 %v444, 4294901760
    %658 = vmatpush.msra.mxu0 %v657
    %v659 = vand.u32 %v443, 4294901760
    %660 = vmatpush.msra.mxu0 %v659
    %v661 = vand.u32 %v442, 4294901760
    %662 = vmatpush.msra.mxu0 %v661
    %v663 = vand.u32 %v441, 4294901760
    %664 = vmatpush.msra.mxu0 %v663
    %v665 = vand.u32 %v440, 4294901760
    %666 = vmatpush.msra.mxu0 %v665
    %v667 = vand.u32 %v439, 4294901760
    %668 = vmatpush.msra.mxu0 %v667
    %v669 = vand.u32 %v438, 4294901760
    %670 = vmatpush.msra.mxu0 %v669
    %v671 = vand.u32 %v437, 4294901760
    %672 = vmatpush.msra.mxu0 %v671
    %v673 = vand.u32 %v436, 4294901760
    %674 = vmatpush.msra.mxu0 %v673
    %v675 = vand.u32 %v435, 4294901760
    %676 = vmatpush.msra.mxu0 %v675
    %v677 = vand.u32 %v434, 4294901760
    %678 = vmatpush.msra.mxu0 %v677
    %v679 = vand.u32 %v433, 4294901760
    %680 = vmatpush.msra.mxu0 %v679
    %v681 = vand.u32 %v432, 4294901760
    %v682 = vsub.f32 %v432, %v681
    %v683 = vand.u32 %v682, 4294901760
    %684 = vmatmul.f32.gmra.mxu0 %v683
    %v685 = vpop.f32.mrf.mxu0
    %v686 = vadd.f32 %v647, %v685
    %687 = vdwg.mxu0
    %v688 = vand.u32 %v448, 4294901760
    %v689 = vsub.f32 %v448, %v688
    %v690 = vand.u32 %v689, 4294901760
    %691 = vmatpush.msra.mxu0 %v690
    %v692 = vand.u32 %v447, 4294901760
    %v693 = vsub.f32 %v447, %v692
    %v694 = vand.u32 %v693, 4294901760
    %695 = vmatpush.msra.mxu0 %v694
    %v696 = vand.u32 %v446, 4294901760
    %v697 = vsub.f32 %v446, %v696
    %v698 = vand.u32 %v697, 4294901760
    %699 = vmatpush.msra.mxu0 %v698
    %v700 = vand.u32 %v445, 4294901760
    %v701 = vsub.f32 %v445, %v700
    %v702 = vand.u32 %v701, 4294901760
    %703 = vmatpush.msra.mxu0 %v702
    %v704 = vand.u32 %v444, 4294901760
    %v705 = vsub.f32 %v444, %v704
    %v706 = vand.u32 %v705, 4294901760
    %707 = vmatpush.msra.mxu0 %v706
    %v708 = vand.u32 %v443, 4294901760
    %v709 = vsub.f32 %v443, %v708
    %v710 = vand.u32 %v709, 4294901760
    %711 = vmatpush.msra.mxu0 %v710
    %v712 = vand.u32 %v442, 4294901760
    %v713 = vsub.f32 %v442, %v712
    %v714 = vand.u32 %v713, 4294901760
    %715 = vmatpush.msra.mxu0 %v714
    %v716 = vand.u32 %v441, 4294901760
    %v717 = vsub.f32 %v441, %v716
    %v718 = vand.u32 %v717, 4294901760
    %719 = vmatpush.msra.mxu0 %v718
    %v720 = vand.u32 %v440, 4294901760
    %v721 = vsub.f32 %v440, %v720
    %v722 = vand.u32 %v721, 4294901760
    %723 = vmatpush.msra.mxu0 %v722
    %v724 = vand.u32 %v439, 4294901760
    %v725 = vsub.f32 %v439, %v724
    %v726 = vand.u32 %v725, 4294901760
    %727 = vmatpush.msra.mxu0 %v726
    %v728 = vand.u32 %v438, 4294901760
    %v729 = vsub.f32 %v438, %v728
    %v730 = vand.u32 %v729, 4294901760
    %731 = vmatpush.msra.mxu0 %v730
    %v732 = vand.u32 %v437, 4294901760
    %v733 = vsub.f32 %v437, %v732
    %v734 = vand.u32 %v733, 4294901760
    %735 = vmatpush.msra.mxu0 %v734
    %v736 = vand.u32 %v436, 4294901760
    %v737 = vsub.f32 %v436, %v736
    %v738 = vand.u32 %v737, 4294901760
    %739 = vmatpush.msra.mxu0 %v738
    %v740 = vand.u32 %v435, 4294901760
    %v741 = vsub.f32 %v435, %v740
    %v742 = vand.u32 %v741, 4294901760
    %743 = vmatpush.msra.mxu0 %v742
    %v744 = vand.u32 %v434, 4294901760
    %v745 = vsub.f32 %v434, %v744
    %v746 = vand.u32 %v745, 4294901760
    %747 = vmatpush.msra.mxu0 %v746
    %v748 = vand.u32 %v433, 4294901760
    %v749 = vsub.f32 %v433, %v748
    %v750 = vand.u32 %v749, 4294901760
    %751 = vmatpush.msra.mxu0 %v750
    %v752 = vand.u32 %v432, 4294901760
    %753 = vmatmul.f32.gmra.mxu0 %v752
    %v754 = vpop.f32.mrf.mxu0
    %v755 = vadd.f32 %v686, %v754
    %756 = vdwg.mxu0
    %v757 = vand.u32 %v448, 4294901760
    %758 = vmatpush.msra.mxu0 %v757
    %v759 = vand.u32 %v447, 4294901760
    %760 = vmatpush.msra.mxu0 %v759
    %v761 = vand.u32 %v446, 4294901760
    %762 = vmatpush.msra.mxu0 %v761
    %v763 = vand.u32 %v445, 4294901760
    %764 = vmatpush.msra.mxu0 %v763
    %v765 = vand.u32 %v444, 4294901760
    %766 = vmatpush.msra.mxu0 %v765
    %v767 = vand.u32 %v443, 4294901760
    %768 = vmatpush.msra.mxu0 %v767
    %v769 = vand.u32 %v442, 4294901760
    %770 = vmatpush.msra.mxu0 %v769
    %v771 = vand.u32 %v441, 4294901760
    %772 = vmatpush.msra.mxu0 %v771
    %v773 = vand.u32 %v440, 4294901760
    %774 = vmatpush.msra.mxu0 %v773
    %v775 = vand.u32 %v439, 4294901760
    %776 = vmatpush.msra.mxu0 %v775
    %v777 = vand.u32 %v438, 4294901760
    %778 = vmatpush.msra.mxu0 %v777
    %v779 = vand.u32 %v437, 4294901760
    %780 = vmatpush.msra.mxu0 %v779
    %v781 = vand.u32 %v436, 4294901760
    %782 = vmatpush.msra.mxu0 %v781
    %v783 = vand.u32 %v435, 4294901760
    %784 = vmatpush.msra.mxu0 %v783
    %v785 = vand.u32 %v434, 4294901760
    %786 = vmatpush.msra.mxu0 %v785
    %v787 = vand.u32 %v433, 4294901760
    %788 = vmatpush.msra.mxu0 %v787
    %v789 = vand.u32 %v432, 4294901760
    %790 = vmatmul.f32.gmra.mxu0 %v789
    %v791 = vpop.f32.mrf.mxu0
    %v792 = vadd.f32 %v755, %v791
    %793 = vdwg.mxu0
    %794 = vst [vmem:[#allocation7] sm:$0xff] %v792
    // Predicated region
    $region38: #{_linear_mapping_impl.1} parent=1 // pred_check
      _
    $region39: #{_linear_mapping_impl.1} parent=1 // pred_check_branch
      %796 = sbr.rel (0) target = $region41
    $region40: #{_linear_mapping_impl.1} parent=1 // pred_region
      %798 = vsyncadd [#allocation4], 0
      %s800 = sshll.u32 [#allocation7], 4
      %s801 = int_to_ptr.vmem [resolvable:$true] %s800
      %s802 = sshll.u32 %s7, 4
      %s803 = int_to_ptr.hbm [resolvable:$true] %s802
      %805 = dma.vmem_to_hbm [thread:$0]  %s801, 128, %s803, [#allocation4]
    $region41: #{_linear_mapping_impl.1} parent=1 // pred_fallthru
      _
    // Predicated region
    $region42: #{_linear_mapping_impl.1} parent=1 // pred_check
      _
    $region43: #{_linear_mapping_impl.1} parent=1 // pred_check_branch
      %807 = sbr.rel (0) target = $region45
    $region44: #{_linear_mapping_impl.1} parent=1 // pred_region
      %809 = dma.done [#allocation4], 128
    $region45: #{_linear_mapping_impl.1} parent=1 // pred_fallthru
      _
    %810 = vsyncpa [#allocation3], 1
    %811 = vsyncpa [#allocation6], 1
    %812 = vsyncpa [#allocation4], 1

</llo_original>
